<compile_context>
chip_gen: v5e
topology: v5e:2x2
jax: 0.10.0
libtpu: 0.0.40
codegen_flags: <defaults>
</compile_context>

<pallas_src>
import jax
import jax.numpy as jnp
from jax.experimental import pallas as pl
from jax.experimental.pallas import tpu as pltpu


DD = 128                      # hidden width from the module (`dd = 128`)
_VMEM_TILE_BUDGET = 10 << 20  # bytes for the double-buffered x/out blocks
_VMEM_LIMIT_BYTES = 32 << 20  # explicit scoped-VMEM limit (legal on v5e..v7x)
_MAX_TILE_B = 8192            # row ceiling per grid step


def _icm_feature_kernel(x_ref, w1_ref, w2_ref, w3_ref, b_ref, o_ref):
    # x_ref:  (TB, D_in)  f32/bf16 VMEM (batch tile)
    # wN_ref: (D_in, DD)  bf16     VMEM (input-major, resident across grid)
    # b_ref:  (3, DD)     f32      VMEM (stacked biases b1,b2,b3)
    # o_ref:  (TB, DD)    f32/bf16 VMEM
    x = x_ref[...].astype(jnp.bfloat16)        # bf16 into the MXU
    b = b_ref[...]                             # f32 biases

    h1 = jnp.dot(x, w1_ref[...], preferred_element_type=jnp.float32)
    h1 = jnp.maximum(h1 + b[0:1, :], 0.0)      # f32 epilogue (VPU)

    h2 = jnp.dot(h1.astype(jnp.bfloat16), w2_ref[...],
                 preferred_element_type=jnp.float32)
    h2 = jnp.maximum(h2 + b[1:2, :], 0.0)

    h3 = jnp.dot(h2.astype(jnp.bfloat16), w3_ref[...],
                 preferred_element_type=jnp.float32)
    o_ref[...] = (h3 + b[2:3, :]).astype(o_ref.dtype)


def _default_tile_b(B, d_in, x_itemsize, out_itemsize):
    """VMEM-budgeted, 8-aligned batch tile.

    Double-buffered x/out blocks are sized against _VMEM_TILE_BUDGET (well
    under v5e's 16 MiB default scoped VMEM and our explicit 32 MiB limit),
    capped at _MAX_TILE_B rows, and clamped so the grid has >= 2 steps
    whenever B allows (so v7x's 2 TensorCores both get work).
    """
    if B <= 8:
        return B                                   # full-array block is legal
    per_row = d_in * x_itemsize + DD * out_itemsize
    vmem_cap = _VMEM_TILE_BUDGET // (2 * per_row)  # 2x for double buffering
    tb = min(B, _MAX_TILE_B, int(vmem_cap))
    # >= 2 grid steps: tile_b <= round_up(cdiv(B, 2), 8)
    two_step = ((-(-B // 2)) + 7) // 8 * 8
    tb = min(tb, two_step)
    tb -= tb % 8                                   # sublane (8) alignment
    return max(8, tb)


def prepare_icm_params(params):
    """One-time parameter prep (hoisted out of the per-call path).

    Casts the three weights to bf16 (MXU operand dtype) and stacks the three
    (1,128) biases into a single (3,128) f32 array, cutting per-call XLA op
    launches and BlockSpec/DMA-descriptor count.
    """
    return {
        "w1": params["w1"].astype(jnp.bfloat16),
        "w2": params["w2"].astype(jnp.bfloat16),
        "w3": params["w3"].astype(jnp.bfloat16),
        "b": jnp.concatenate(
            [params["b1"], params["b2"], params["b3"]], axis=0
        ).astype(jnp.float32),
    }


def icm_forward(x, prepared, *, tile_b=None, out_dtype=jnp.float32):
    """Pallas implementation of ICM.forward (== get_feature).

    x:        (B, D_in), f32 or bf16 (used in its native dtype; no upcast)
    prepared: output of prepare_icm_params()
    out_dtype: jnp.float32 (default, matches PyTorch) or jnp.bfloat16
               (halves the dominant output HBM stream for bf16 consumers).
    """
    B, D_in = x.shape
    w1, w2, w3, b = prepared["w1"], prepared["w2"], prepared["w3"], prepared["b"]
    assert w1.shape == (D_in, DD) and w2.shape == (DD, DD) and w3.shape == (DD, DD)

    x_isz = jnp.dtype(x.dtype).itemsize
    o_isz = jnp.dtype(out_dtype).itemsize
    if tile_b is None:
        tile_b = _default_tile_b(B, D_in, x_isz, o_isz)
    if not (tile_b == B or tile_b % 8 == 0):
        raise ValueError(f"tile_b={tile_b} must equal B or be a multiple of 8")

    grid = (pl.cdiv(B, tile_b),)

    # Weights / biases are resident (same block) across the batch grid.
    def rep(arr):
        return pl.BlockSpec(arr.shape, lambda i: (0, 0))

    return pl.pallas_call(
        _icm_feature_kernel,
        out_shape=jax.ShapeDtypeStruct((B, DD), out_dtype),
        grid_spec=pltpu.PrefetchScalarGridSpec(
            num_scalar_prefetch=0,
            grid=grid,
            in_specs=[
                pl.BlockSpec((tile_b, D_in), lambda i: (i, 0)),  # x tile
                rep(w1), rep(w2), rep(w3), rep(b),
            ],
            out_specs=pl.BlockSpec((tile_b, DD), lambda i: (i, 0)),
        ),
        compiler_params=pltpu.CompilerParams(
            dimension_semantics=("parallel",),
            vmem_limit_bytes=_VMEM_LIMIT_BYTES,
        ),
    )(x, w1, w2, w3, b)


def init_icm_params(key, input_dim, num_actions=4):
    """Deterministic synthetic parameter init (shapes follow ICM.__init__).

    Only linear1/2/3 feed the forward kernel; the pred/invpred layers are
    initialized only for shape completeness (not used by forward()).
    """
    keys = jax.random.split(key, 14)
    dd = DD

    def lin(kw, kb, d_in, d_out):
        bound = 1.0 / jnp.sqrt(jnp.float32(d_in))
        w = jax.random.uniform(kw, (d_in, d_out), jnp.float32, -bound, bound)
        b = jax.random.uniform(kb, (1, d_out), jnp.float32, -bound, bound)
        return w, b

    w1, b1 = lin(keys[0], keys[1], input_dim, dd)
    w2, b2 = lin(keys[2], keys[3], dd, dd)
    w3, b3 = lin(keys[4], keys[5], dd, dd)
    # Unused-by-forward layers (pred_module1/2, invpred_module1/2):
    _ = lin(keys[6], keys[7], dd + num_actions, dd)
    _ = lin(keys[8], keys[9], dd, dd)
    _ = lin(keys[10], keys[11], dd + dd, dd)
    _ = lin(keys[12], keys[13], dd, num_actions)
    return {"w1": w1, "b1": b1, "w2": w2, "b2": b2, "w3": w3, "b3": b3}


def icm_forward_ref(x, p):
    """Pure-JAX f32 reference (matches the PyTorch forward semantics)."""
    h = jnp.maximum(x @ p["w1"] + p["b1"], 0.0)
    h = jnp.maximum(h @ p["w2"] + p["b2"], 0.0)
    return h @ p["w3"] + p["b3"]


if __name__ == "__main__":
    key = jax.random.PRNGKey(0)
    k_param, k_x = jax.random.split(key)

    B = 96         # small batch; 96 % 8 == 0
    D_IN = 32      # input_dim[0]
    NUM_ACTIONS = 4

    params = init_icm_params(k_param, D_IN, NUM_ACTIONS)
    prepared = prepare_icm_params(params)          # one-time hoisted prep
    x = jax.random.normal(k_x, (B, D_IN), jnp.float32)

    # Default path: VMEM-budgeted tile (48 rows here -> 2-step parallel grid,
    # so both v7x TensorCores get work).
    out = jax.block_until_ready(icm_forward(x, prepared))
    # Explicit-tile path (grid = 3) to exercise the pipelined tiling.
    out_tiled = jax.block_until_ready(icm_forward(x, prepared, tile_b=32))
    # bf16-output path (halved output HBM stream for bf16 consumers).
    out_bf16 = jax.block_until_ready(
        icm_forward(x, prepared, out_dtype=jnp.bfloat16))

    ref = icm_forward_ref(x, params)
    assert out.shape == (B, DD) and out.dtype == jnp.float32
    assert out_bf16.dtype == jnp.bfloat16
    # bf16 MXU operands with f32 accumulation -> loose tolerance vs f32 ref.
    err = float(jnp.max(jnp.abs(out - ref)))
    assert err < 1e-1, err
    # Tiling must not change per-row math.
    assert float(jnp.max(jnp.abs(out_tiled - out))) < 1e-5
    # bf16 output only adds one final rounding step.
    assert float(jnp.max(jnp.abs(out_bf16.astype(jnp.float32) - out))) < 5e-2

    print("KERNEL_OK")
</pallas_src>

<mosaic_0001>
module attributes {stable_mosaic.version = 11 : i64} {
  func.func @_icm_feature_kernel(%arg0: i32, %arg1: memref<48x32xf32, #tpu.memory_space<vmem>>, %arg2: memref<32x128xbf16, #tpu.memory_space<vmem>>, %arg3: memref<128x128xbf16, #tpu.memory_space<vmem>>, %arg4: memref<128x128xbf16, #tpu.memory_space<vmem>>, %arg5: memref<3x128xf32, #tpu.memory_space<vmem>>, %arg6: memref<48x128xf32, #tpu.memory_space<vmem>>) attributes {dimension_semantics = [#tpu.dimension_semantics<parallel>], iteration_bounds = array<i64: 2>, scalar_prefetch = 0 : i64, scratch_operands = 0 : i64, tpu.core_type = #tpu.core_type<tc>, window_params = [{transform_indices = @transform_0, window_bounds = array<i64: 48, 32>}, {pipeline_mode = #tpu.pipeline_mode<synchronous>, transform_indices = @transform_1, window_bounds = array<i64: 32, 128>}, {pipeline_mode = #tpu.pipeline_mode<synchronous>, transform_indices = @transform_2, window_bounds = array<i64: 128, 128>}, {pipeline_mode = #tpu.pipeline_mode<synchronous>, transform_indices = @transform_3, window_bounds = array<i64: 128, 128>}, {pipeline_mode = #tpu.pipeline_mode<synchronous>, transform_indices = @transform_4, window_bounds = array<i64: 3, 128>}, {transform_indices = @transform_5, window_bounds = array<i64: 48, 128>}]} {
    %c0 = arith.constant 0 : index
    %c0_0 = arith.constant 0 : index
    %0 = vector.load %arg1[%c0, %c0_0] : memref<48x32xf32, #tpu.memory_space<vmem>>, vector<48x32xf32>
    %1 = arith.truncf %0 : vector<48x32xf32> to vector<48x32xbf16>
    %c0_1 = arith.constant 0 : index
    %c0_2 = arith.constant 0 : index
    %2 = vector.load %arg5[%c0_1, %c0_2] : memref<3x128xf32, #tpu.memory_space<vmem>>, vector<3x128xf32>
    %c0_3 = arith.constant 0 : index
    %c0_4 = arith.constant 0 : index
    %3 = vector.load %arg2[%c0_3, %c0_4] : memref<32x128xbf16, #tpu.memory_space<vmem>>, vector<32x128xbf16>
    %cst = arith.constant dense<0.000000e+00> : vector<48x128xf32>
    %4 = tpu.matmul %1, %3, %cst {dimension_numbers = #tpu.dot_dimension_numbers<[1], [0], [0], [1], [0, 0, 1, 1], [], []>} : vector<48x32xbf16>, vector<32x128xbf16>, vector<48x128xf32> -> vector<48x128xf32>
    %5 = vector.extract_strided_slice %2 {offsets = [0, 0], sizes = [1, 128], strides = [1, 1]} : vector<3x128xf32> to vector<1x128xf32>
    %6 = vector.broadcast %5 : vector<1x128xf32> to vector<48x128xf32>
    %7 = arith.addf %4, %6 : vector<48x128xf32>
    %cst_5 = arith.constant 0.000000e+00 : f32
    %8 = vector.broadcast %cst_5 : f32 to vector<48x128xf32>
    %9 = arith.maximumf %7, %8 : vector<48x128xf32>
    %10 = arith.truncf %9 : vector<48x128xf32> to vector<48x128xbf16>
    %c0_6 = arith.constant 0 : index
    %c0_7 = arith.constant 0 : index
    %11 = vector.load %arg3[%c0_6, %c0_7] : memref<128x128xbf16, #tpu.memory_space<vmem>>, vector<128x128xbf16>
    %cst_8 = arith.constant dense<0.000000e+00> : vector<48x128xf32>
    %12 = tpu.matmul %10, %11, %cst_8 {dimension_numbers = #tpu.dot_dimension_numbers<[1], [0], [0], [1], [0, 0, 1, 1], [], []>} : vector<48x128xbf16>, vector<128x128xbf16>, vector<48x128xf32> -> vector<48x128xf32>
    %13 = vector.extract_strided_slice %2 {offsets = [1, 0], sizes = [1, 128], strides = [1, 1]} : vector<3x128xf32> to vector<1x128xf32>
    %14 = vector.broadcast %13 : vector<1x128xf32> to vector<48x128xf32>
    %15 = arith.addf %12, %14 : vector<48x128xf32>
    %cst_9 = arith.constant 0.000000e+00 : f32
    %16 = vector.broadcast %cst_9 : f32 to vector<48x128xf32>
    %17 = arith.maximumf %15, %16 : vector<48x128xf32>
    %18 = arith.truncf %17 : vector<48x128xf32> to vector<48x128xbf16>
    %c0_10 = arith.constant 0 : index
    %c0_11 = arith.constant 0 : index
    %19 = vector.load %arg4[%c0_10, %c0_11] : memref<128x128xbf16, #tpu.memory_space<vmem>>, vector<128x128xbf16>
    %cst_12 = arith.constant dense<0.000000e+00> : vector<48x128xf32>
    %20 = tpu.matmul %18, %19, %cst_12 {dimension_numbers = #tpu.dot_dimension_numbers<[1], [0], [0], [1], [0, 0, 1, 1], [], []>} : vector<48x128xbf16>, vector<128x128xbf16>, vector<48x128xf32> -> vector<48x128xf32>
    %21 = vector.extract_strided_slice %2 {offsets = [2, 0], sizes = [1, 128], strides = [1, 1]} : vector<3x128xf32> to vector<1x128xf32>
    %22 = vector.broadcast %21 : vector<1x128xf32> to vector<48x128xf32>
    %23 = arith.addf %20, %22 : vector<48x128xf32>
    %c0_13 = arith.constant 0 : index
    %c0_14 = arith.constant 0 : index
    %24 = vector.load %arg6[%c0_13, %c0_14] : memref<48x128xf32, #tpu.memory_space<vmem>>, vector<48x128xf32>
    tpu.vector_store %arg6[%c0_13, %c0_14], %23 {strides = array<i32>} : memref<48x128xf32, #tpu.memory_space<vmem>>, vector<48x128xf32>,
    return
  }
  func.func @transform_0(%arg0: i32) -> (i32, i32) {
    %c0_i32 = arith.constant 0 : i32
    %c0_i32_0 = arith.constant 0 : i32
    return %arg0, %c0_i32 : i32, i32
  }
  func.func @transform_1(%arg0: i32) -> (i32, i32) {
    %c0_i32 = arith.constant 0 : i32
    %c0_i32_0 = arith.constant 0 : i32
    %c0_i32_1 = arith.constant 0 : i32
    return %c0_i32, %c0_i32_0 : i32, i32
  }
  func.func @transform_2(%arg0: i32) -> (i32, i32) {
    %c0_i32 = arith.constant 0 : i32
    %c0_i32_0 = arith.constant 0 : i32
    %c0_i32_1 = arith.constant 0 : i32
    return %c0_i32, %c0_i32_0 : i32, i32
  }
  func.func @transform_3(%arg0: i32) -> (i32, i32) {
    %c0_i32 = arith.constant 0 : i32
    %c0_i32_0 = arith.constant 0 : i32
    %c0_i32_1 = arith.constant 0 : i32
    return %c0_i32, %c0_i32_0 : i32, i32
  }
  func.func @transform_4(%arg0: i32) -> (i32, i32) {
    %c0_i32 = arith.constant 0 : i32
    %c0_i32_0 = arith.constant 0 : i32
    %c0_i32_1 = arith.constant 0 : i32
    return %c0_i32, %c0_i32_0 : i32, i32
  }
  func.func @transform_5(%arg0: i32) -> (i32, i32) {
    %c0_i32 = arith.constant 0 : i32
    %c0_i32_0 = arith.constant 0 : i32
    return %arg0, %c0_i32 : i32, i32
  }
}

</mosaic_0001>

<llo_original>
// kernel: tpu_custom_call.1
$region0: #{tpu_custom_call.1}
  #allocation0 [shape = 'u32[]', space=smem, size = 0x4, offset = 0x4, fixed_abs, tag = 'smem constant byte address 0x4 - core index']
  #allocation1 [shape = 'u32[72,128]{1,0:T(1,128)}', space=vmem, size = 0x9000, scoped, tag = 'internal scratch']
  %s0 = inlined_call_operand.vmem [shape: f32[96,32], index: 0, kind: input, shape index: {}]
  %s1 = inlined_call_operand.hbm [shape: bf16[32,128], index: 1, kind: input, shape index: {}]
  %s2 = inlined_call_operand.vmem [shape: bf16[128,128], index: 2, kind: input, shape index: {}]
  %s3 = inlined_call_operand.vmem [shape: bf16[128,128], index: 3, kind: input, shape index: {}]
  %s4 = inlined_call_operand.hbm [shape: f32[3,128], index: 4, kind: input, shape index: {}]
  %s5 = inlined_call_operand.hbm [shape: f32[96,128], index: 5, kind: output, shape index: {}]
  %s6 = sld [smem:[#allocation0]]
  $region61: #{tpu_custom_call.1} parent=0
    _
  %s8 = ssub.s32 1, %s6
  %s9 = scalar_select 0, %s8, %s6
  $region1: #{tpu_custom_call.1} parent=0
    #allocation2 [shape = 'u8[8192]{0}', space=vmem, size = 0x2000, scoped, tag = 'input window, operand 1, single buffered']
    #allocation3 [shape = 's32[2]{0}', space=sflag, size = 0x8, scoped, tag = 'scoped memory for tpu_custom_call.1']
    #allocation4 [shape = 's32[2]{0}', space=sflag, size = 0x8, scoped, tag = 'scoped memory for tpu_custom_call.1']
    #allocation5 [shape = 'u8[2048]{0}', space=vmem, size = 0x800, scoped, tag = 'input window, operand 4, single buffered']
    #allocation6 [shape = 's32[1]{0}', space=sflag, size = 0x4, scoped, tag = 'scoped memory for tpu_custom_call.1']
    #allocation7 [shape = 'u8[49152]{0}', space=vmem, size = 0xc000, scoped, tag = 'output window, operand 0']
    %10 = vsyncpa [#allocation3], 0
    %11 = vsyncpa [#allocation6], 0
    %12 = vsyncpa [#allocation4], 0
    %s13 = scalar_lea.sflag [#allocation4], 1
    %14 = vsyncpa %s13, 0
    loop: start=0, step=1, limit=4
    $region2: #{tpu_custom_call.1} parent=1 // loop_pre_header
      _
    $region3: #{tpu_custom_call.1} parent=1 // loop_header
      %s16 = sphi 0, %s20
      %p17 = scmp.ge.s32.totalorder %s16, 4
      %s26 = sphi 0, %s28
      %s29 = sphi 0, %s26
      %s30 = sphi 0, %s29
      %s46 = sphi 0, %s30
      %s50 = sphi 0, %s50
      %s52 = sphi 0, %s50
      %s53 = sphi 0, %s52
      %s67 = sphi 0, %s53
      %s71 = sphi 0, %s71
      %s73 = sphi 0, %s71
      %s74 = sphi 0, %s73
      %s88 = sphi 0, %s74
      %s92 = sphi 0, %s92
      %s94 = sphi 0, %s92
      %s95 = sphi 0, %s94
      %s109 = sphi 0, %s95
      %s113 = sphi 0, %s113
      %s115 = sphi 0, %s113
      %s116 = sphi 0, %s115
      %s130 = sphi 0, %s116
      %s136 = sphi 0, %s138
      %s139 = sphi 0, %s136
      %s140 = sphi 0, %s139
      %s156 = sphi 0, %s140
    $region4: #{tpu_custom_call.1} parent=1 // loop_header_branch
      %19 = sbr.rel (%p17) target = $region8
    $region5: #{tpu_custom_call.1} parent=1 // loop_body
      %s21 = ssub.s32 %s16, 1
      %s22 = ssub.s32 %s16, 2
      %s23 = sadd.s32 %s16, 1
      %s24 = ssub.s32 %s16, %s23
      %p25 = scmp.eq.s32.totalorder %s24, 0
      %s27 = sadd.s32 %s26, 1
      %s28 = scalar_select %p25, %s26, %s27
      %p31 = pneg %p25
      %p32 = scmp.eq.s32.totalorder %s16, 1
      %p33 = por %p31, %p32
      %p34 = scmp.ne.s32.totalorder %s26, %s29
      %p35 = scmp.eq.s32.totalorder %s16, 0
      %p36 = por %p34, %p35
      %p37 = scmp.ne.s32.totalorder %s26, %s29
      %p38 = scmp.eq.s32.totalorder %s21, 1
      %p39 = por %p37, %p38
      %p40 = scmp.ne.s32.totalorder %s29, %s30
      %p41 = scmp.eq.s32.totalorder %s21, 0
      %p42 = por %p40, %p41
      %p43 = scmp.ne.s32.totalorder %s29, %s30
      %p44 = scmp.eq.s32.totalorder %s22, 1
      %p45 = por %p43, %p44
      %p47 = scmp.ne.s32.totalorder %s30, %s46
      %p48 = scmp.eq.s32.totalorder %s22, 0
      %p49 = por %p47, %p48
      %s51 = sadd.s32 %s50, 1
      %p54 = scmp.eq.s32.totalorder %s16, 1
      %p55 = scmp.ne.s32.totalorder %s50, %s52
      %p56 = scmp.eq.s32.totalorder %s16, 0
      %p57 = por %p55, %p56
      %p58 = scmp.ne.s32.totalorder %s50, %s52
      %p59 = scmp.eq.s32.totalorder %s21, 1
      %p60 = por %p58, %p59
      %p61 = scmp.ne.s32.totalorder %s52, %s53
      %p62 = scmp.eq.s32.totalorder %s21, 0
      %p63 = por %p61, %p62
      %p64 = scmp.ne.s32.totalorder %s52, %s53
      %p65 = scmp.eq.s32.totalorder %s22, 1
      %p66 = por %p64, %p65
      %p68 = scmp.ne.s32.totalorder %s53, %s67
      %p69 = scmp.eq.s32.totalorder %s22, 0
      %p70 = por %p68, %p69
      %s72 = sadd.s32 %s71, 1
      %p75 = scmp.eq.s32.totalorder %s16, 1
      %p76 = scmp.ne.s32.totalorder %s71, %s73
      %p77 = scmp.eq.s32.totalorder %s16, 0
      %p78 = por %p76, %p77
      %p79 = scmp.ne.s32.totalorder %s71, %s73
      %p80 = scmp.eq.s32.totalorder %s21, 1
      %p81 = por %p79, %p80
      %p82 = scmp.ne.s32.totalorder %s73, %s74
      %p83 = scmp.eq.s32.totalorder %s21, 0
      %p84 = por %p82, %p83
      %p85 = scmp.ne.s32.totalorder %s73, %s74
      %p86 = scmp.eq.s32.totalorder %s22, 1
      %p87 = por %p85, %p86
      %p89 = scmp.ne.s32.totalorder %s74, %s88
      %p90 = scmp.eq.s32.totalorder %s22, 0
      %p91 = por %p89, %p90
      %s93 = sadd.s32 %s92, 1
      %p96 = scmp.eq.s32.totalorder %s16, 1
      %p97 = scmp.ne.s32.totalorder %s92, %s94
      %p98 = scmp.eq.s32.totalorder %s16, 0
      %p99 = por %p97, %p98
      %p100 = scmp.ne.s32.totalorder %s92, %s94
      %p101 = scmp.eq.s32.totalorder %s21, 1
      %p102 = por %p100, %p101
      %p103 = scmp.ne.s32.totalorder %s94, %s95
      %p104 = scmp.eq.s32.totalorder %s21, 0
      %p105 = por %p103, %p104
      %p106 = scmp.ne.s32.totalorder %s94, %s95
      %p107 = scmp.eq.s32.totalorder %s22, 1
      %p108 = por %p106, %p107
      %p110 = scmp.ne.s32.totalorder %s95, %s109
      %p111 = scmp.eq.s32.totalorder %s22, 0
      %p112 = por %p110, %p111
      %s114 = sadd.s32 %s113, 1
      %p117 = scmp.eq.s32.totalorder %s16, 1
      %p118 = scmp.ne.s32.totalorder %s113, %s115
      %p119 = scmp.eq.s32.totalorder %s16, 0
      %p120 = por %p118, %p119
      %p121 = scmp.ne.s32.totalorder %s113, %s115
      %p122 = scmp.eq.s32.totalorder %s21, 1
      %p123 = por %p121, %p122
      %p124 = scmp.ne.s32.totalorder %s115, %s116
      %p125 = scmp.eq.s32.totalorder %s21, 0
      %p126 = por %p124, %p125
      %p127 = scmp.ne.s32.totalorder %s115, %s116
      %p128 = scmp.eq.s32.totalorder %s22, 1
      %p129 = por %p127, %p128
      %p131 = scmp.ne.s32.totalorder %s116, %s130
      %p132 = scmp.eq.s32.totalorder %s22, 0
      %p133 = por %p131, %p132
      %s134 = ssub.s32 %s16, %s23
      %p135 = scmp.eq.s32.totalorder %s134, 0
      %s137 = sadd.s32 %s136, 1
      %s138 = scalar_select %p135, %s136, %s137
      %p141 = pneg %p135
      %p142 = scmp.eq.s32.totalorder %s16, 1
      %p143 = por %p141, %p142
      %p144 = scmp.ne.s32.totalorder %s136, %s139
      %p145 = scmp.eq.s32.totalorder %s16, 0
      %p146 = por %p144, %p145
      %p147 = scmp.ne.s32.totalorder %s136, %s139
      %p148 = scmp.eq.s32.totalorder %s21, 1
      %p149 = por %p147, %p148
      %p150 = scmp.ne.s32.totalorder %s139, %s140
      %p151 = scmp.eq.s32.totalorder %s21, 0
      %p152 = por %p150, %p151
      %p153 = scmp.ne.s32.totalorder %s139, %s140
      %p154 = scmp.eq.s32.totalorder %s22, 1
      %p155 = por %p153, %p154
      %p157 = scmp.ne.s32.totalorder %s140, %s156
      %p158 = scmp.eq.s32.totalorder %s22, 0
      %p159 = por %p157, %p158
      %p160 = scmp.le.s32.totalorder 1, %s16
      %p161 = scmp.lt.s32.totalorder %s16, 3
      %p162 = pnand %p160, %p161
      %p163 = pneg %p162
      // Predicated region
      $region9: #{tpu_custom_call.1} parent=5 // pred_check
        _
      $region10: #{tpu_custom_call.1} parent=5 // pred_check_branch
        %165 = sbr.rel (%p162) target = $region12
      $region11: #{tpu_custom_call.1} parent=5 // pred_region
        %s166 = ssub.s32 %s16, 1
        // Predicated region
        $region13: #{tpu_custom_call.1} parent=11 // pred_check
          %p167 = pneg %p63
        $region14: #{tpu_custom_call.1} parent=11 // pred_check_branch
          %169 = sbr.rel (%p167) target = $region16
        $region15: #{tpu_custom_call.1} parent=11 // pred_region
          %171 = vsyncadd [#allocation3], 0
          %s172 = sshll.u32 %s1, 4
          %s173 = int_to_ptr.hbm [resolvable:$true] %s172
          %s174 = sshll.u32 [#allocation2], 4
          %s175 = int_to_ptr.vmem [resolvable:$true] %s174
          %180 = dma.hbm_to_vmem [thread:$0]  %s173, 256, %s175, [#allocation3], 64, 64, 4
        $region16: #{tpu_custom_call.1} parent=11 // pred_fallthru
          _
        // Predicated region
        $region17: #{tpu_custom_call.1} parent=11 // pred_check
          %p181 = pneg %p84
        $region18: #{tpu_custom_call.1} parent=11 // pred_check_branch
          %183 = sbr.rel (%p181) target = $region20
        $region19: #{tpu_custom_call.1} parent=11 // pred_region
          _
        $region20: #{tpu_custom_call.1} parent=11 // pred_fallthru
          _
        // Predicated region
        $region21: #{tpu_custom_call.1} parent=11 // pred_check
          %p184 = pneg %p105
        $region22: #{tpu_custom_call.1} parent=11 // pred_check_branch
          %186 = sbr.rel (%p184) target = $region24
        $region23: #{tpu_custom_call.1} parent=11 // pred_region
          _
        $region24: #{tpu_custom_call.1} parent=11 // pred_fallthru
          _
        // Predicated region
        $region25: #{tpu_custom_call.1} parent=11 // pred_check
          %p187 = pneg %p126
        $region26: #{tpu_custom_call.1} parent=11 // pred_check_branch
          %189 = sbr.rel (%p187) target = $region28
        $region27: #{tpu_custom_call.1} parent=11 // pred_region
          %191 = vsyncadd [#allocation6], 0
          %s193 = sshll.u32 %s4, 4
          %s194 = int_to_ptr.hbm [resolvable:$true] %s193
          %s195 = sshll.u32 [#allocation5], 4
          %s196 = int_to_ptr.vmem [resolvable:$true] %s195
          %198 = dma.hbm_to_vmem [thread:$0]  %s194, 64, %s196, [#allocation6]
        $region28: #{tpu_custom_call.1} parent=11 // pred_fallthru
          _
      $region12: #{tpu_custom_call.1} parent=5 // pred_fallthru
        _
      %p199 = scmp.lt.s32.totalorder %s16, 2
      // Predicated region
      $region29: #{tpu_custom_call.1} parent=5 // pred_check
        %p200 = pneg %p199
      $region30: #{tpu_custom_call.1} parent=5 // pred_check_branch
        %202 = sbr.rel (%p200) target = $region32
      $region31: #{tpu_custom_call.1} parent=5 // pred_region
        // Predicated region
        $region33: #{tpu_custom_call.1} parent=31 // pred_check
          %p203 = pneg %p36
        $region34: #{tpu_custom_call.1} parent=31 // pred_check_branch
          %205 = sbr.rel (%p203) target = $region36
        $region35: #{tpu_custom_call.1} parent=31 // pred_region
          %s206 = smul.u32 6, %s16
          %p207 = scmp.lt.s32.totalorder %s206, 11
          %s208 = scalar_select %p207, %s206, 11
          %s209 = smul.addr %s208, 8
          %s210 = scalar_lea.vmem %s0, %s209
          %s211 = smul.u32 6, %s16
        $region36: #{tpu_custom_call.1} parent=31 // pred_fallthru
          _
      $region32: #{tpu_custom_call.1} parent=5 // pred_fallthru
        _
      %p212 = scmp.le.s32.totalorder 1, %s16
      %p213 = scmp.lt.s32.totalorder %s16, 3
      %p214 = pnand %p212, %p213
      %p215 = pneg %p214
      // Predicated region
      $region37: #{tpu_custom_call.1} parent=5 // pred_check
        _
      $region38: #{tpu_custom_call.1} parent=5 // pred_check_branch
        %217 = sbr.rel (%p214) target = $region40
      $region39: #{tpu_custom_call.1} parent=5 // pred_region
        %s218 = ssub.s32 %s16, 1
        // Predicated region
        $region41: #{tpu_custom_call.1} parent=39 // pred_check
          %p219 = pneg %p63
        $region42: #{tpu_custom_call.1} parent=39 // pred_check_branch
          %221 = sbr.rel (%p219) target = $region44
        $region43: #{tpu_custom_call.1} parent=39 // pred_region
          %223 = dma.done [#allocation3], 256
        $region44: #{tpu_custom_call.1} parent=39 // pred_fallthru
          _
        // Predicated region
        $region45: #{tpu_custom_call.1} parent=39 // pred_check
          %p224 = pneg %p126
        $region46: #{tpu_custom_call.1} parent=39 // pred_check_branch
          %226 = sbr.rel (%p224) target = $region48
        $region47: #{tpu_custom_call.1} parent=39 // pred_region
          %228 = dma.done [#allocation6], 64
        $region48: #{tpu_custom_call.1} parent=39 // pred_fallthru
          _
        %s229 = smul.u32 6, %s21
        %p230 = scmp.lt.s32.totalorder %s229, 11
        %s231 = scalar_select %p230, %s229, 11
        %s232 = smul.addr %s231, 8
        %s233 = scalar_lea.vmem %s0, %s232
        %p234 = pneg %p42
        %p235 = pneg %p39
        %p236 = pneg %p63
        %p237 = pneg %p60
        %p238 = pneg %p84
        %p239 = pneg %p81
        %p240 = pneg %p105
        %p241 = pneg %p102
        %p242 = pneg %p126
        %p243 = pneg %p123
        %p244 = pneg %p152
        %p245 = pneg %p149
        %s246 = sand.u32 %s139, 1
        %s247 = scalar_lea.sflag [#allocation4], %s246
        %s248 = sand.u32 %s139, 1
        %s249 = smul.addr %s248, 48
        %s250 = scalar_lea.vmem [#allocation7], %s249
        %s251 = smul.u32 6, %s21
        %p252 = scmp.lt.s32.totalorder %s251, 11
        %s253 = scalar_select %p252, %s251, 11
        %s254 = smul.addr %s253, 8
        %s255 = scalar_lea.vmem %s0, %s254
        %s256 = smul.u32 6, %s21
        %s257 = smul.u32 6, %s21
        %v259 = vld [vmem:[%s255] sm:$0xff]
        %v260 = vld [vmem:[%s255 + $0x8] sm:$0xff]
        %v261 = vld [vmem:[%s255 + $0x10] sm:$0xff]
        %v262 = vld [vmem:[%s255 + $0x18] sm:$0xff]
        %v263 = vld [vmem:[%s255 + $0x20] sm:$0xff]
        %v264 = vld [vmem:[%s255 + $0x28] sm:$0xff]
        %v265 = vpack.c.bf16 %v260, %v259
        %v266 = vpack.c.bf16 %v262, %v261
        %v267 = vpack.c.bf16 %v264, %v263
        %v268 = vld [vmem:[#allocation5] sm:$0x7]
        %v269 = vld [vmem:[#allocation2] sm:$0xf]
        %v270 = vld [vmem:[#allocation2 + $0x4] sm:$0xf]
        %v271 = vld [vmem:[#allocation2 + $0x8] sm:$0xf]
        %v272 = vld [vmem:[#allocation2 + $0xc] sm:$0xf]
        %v273 = vperm.slane %v268, 0
        %v278 = vunpack.c.l.b16 %v269
        %v279 = vunpack.c.l.b16 %v270
        %v280 = vunpack.c.l.b16 %v271
        %v281 = vunpack.c.l.b16 %v272
        %v282 = vpack.c.b16 %v279, %v278
        %v283 = vpack.c.b16 %v281, %v280
        %vm286 = vcmask 261120
        %v288 = vsel %vm286, %v265, 0
        %v291 = vsel %vm286, %v266, 0
        %v294 = vsel %vm286, %v267, 0
        %296 = vmatpush.bf16.msra.mxu0 0
        %297 = vmatpush.bf16.msra.mxu0 0
        %298 = vmatpush.bf16.msra.mxu0 0
        %299 = vmatpush.bf16.msra.mxu0 0
        %300 = vmatpush.bf16.msra.mxu0 0
        %301 = vmatpush.bf16.msra.mxu0 0
        %302 = vmatpush.bf16.msra.mxu0 %v283
        %303 = vmatpush.bf16.msra.mxu0 %v282
        %304 = vmatmul.bf16.gmra.mxu0 %v288
        %v305 = vpop.f32.mrf.mxu0
        %v306 = vadd.f32 %v273, %v305
        %v307 = vpop.f32.mrf.mxu0
        %v308 = vadd.f32 %v273, %v307
        %309 = vmatmul.bf16.gmra.mxu0 %v291
        %v310 = vpop.f32.mrf.mxu0
        %v311 = vadd.f32 %v273, %v310
        %v312 = vpop.f32.mrf.mxu0
        %v313 = vadd.f32 %v273, %v312
        %314 = vmatmul.bf16.gmra.mxu0 %v294
        %v315 = vpop.f32.mrf.mxu0
        %v316 = vadd.f32 %v273, %v315
        %v317 = vpop.f32.mrf.mxu0
        %v318 = vadd.f32 %v273, %v317
        %319 = vdwg.mxu0
        %v320 = vmax.f32 %v306, 0.0
        %v321 = vmax.f32 %v308, 0.0
        %v322 = vmax.f32 %v311, 0.0
        %v323 = vmax.f32 %v313, 0.0
        %v324 = vmax.f32 %v316, 0.0
        %v325 = vmax.f32 %v318, 0.0
        %v326 = vpack.c.bf16 %v321, %v320
        %v327 = vpack.c.bf16 %v323, %v322
        %v328 = vpack.c.bf16 %v325, %v324
        %v329 = vld [vmem:[%s2] sm:$0xf]
        %v330 = vld [vmem:[%s2 + $0x4] sm:$0xf]
        %v331 = vld [vmem:[%s2 + $0x8] sm:$0xf]
        %v332 = vld [vmem:[%s2 + $0xc] sm:$0xf]
        %v333 = vld [vmem:[%s2 + $0x10] sm:$0xf]
        %v334 = vld [vmem:[%s2 + $0x14] sm:$0xf]
        %v335 = vld [vmem:[%s2 + $0x18] sm:$0xf]
        %v336 = vld [vmem:[%s2 + $0x1c] sm:$0xf]
        %v337 = vld [vmem:[%s2 + $0x20] sm:$0xf]
        %v338 = vld [vmem:[%s2 + $0x24] sm:$0xf]
        %v339 = vld [vmem:[%s2 + $0x28] sm:$0xf]
        %v340 = vld [vmem:[%s2 + $0x2c] sm:$0xf]
        %v341 = vld [vmem:[%s2 + $0x30] sm:$0xf]
        %v342 = vld [vmem:[%s2 + $0x34] sm:$0xf]
        %v343 = vld [vmem:[%s2 + $0x38] sm:$0xf]
        %v344 = vld [vmem:[%s2 + $0x3c] sm:$0xf]
        %v345 = vperm.slane %v268, 1
        %v362 = vunpack.c.l.b16 %v329
        %v363 = vunpack.c.l.b16 %v330
        %v364 = vunpack.c.l.b16 %v331
        %v365 = vunpack.c.l.b16 %v332
        %v366 = vunpack.c.l.b16 %v333
        %v367 = vunpack.c.l.b16 %v334
        %v368 = vunpack.c.l.b16 %v335
        %v369 = vunpack.c.l.b16 %v336
        %v370 = vunpack.c.l.b16 %v337
        %v371 = vunpack.c.l.b16 %v338
        %v372 = vunpack.c.l.b16 %v339
        %v373 = vunpack.c.l.b16 %v340
        %v374 = vunpack.c.l.b16 %v341
        %v375 = vunpack.c.l.b16 %v342
        %v376 = vunpack.c.l.b16 %v343
        %v377 = vunpack.c.l.b16 %v344
        %v378 = vpack.c.b16 %v363, %v362
        %v379 = vpack.c.b16 %v365, %v364
        %v380 = vpack.c.b16 %v367, %v366
        %v381 = vpack.c.b16 %v369, %v368
        %v382 = vpack.c.b16 %v371, %v370
        %v383 = vpack.c.b16 %v373, %v372
        %v384 = vpack.c.b16 %v375, %v374
        %v385 = vpack.c.b16 %v377, %v376
        %394 = vmatpush.bf16.msra.mxu0 %v385
        %395 = vmatpush.bf16.msra.mxu0 %v384
        %396 = vmatpush.bf16.msra.mxu0 %v383
        %397 = vmatpush.bf16.msra.mxu0 %v382
        %398 = vmatpush.bf16.msra.mxu0 %v381
        %399 = vmatpush.bf16.msra.mxu0 %v380
        %400 = vmatpush.bf16.msra.mxu0 %v379
        %401 = vmatpush.bf16.msra.mxu0 %v378
        %402 = vmatmul.bf16.gmra.mxu0 %v326
        %v403 = vpop.f32.mrf.mxu0
        %v404 = vadd.f32 %v345, %v403
        %v405 = vpop.f32.mrf.mxu0
        %v406 = vadd.f32 %v345, %v405
        %407 = vmatmul.bf16.gmra.mxu0 %v327
        %v408 = vpop.f32.mrf.mxu0
        %v409 = vadd.f32 %v345, %v408
        %v410 = vpop.f32.mrf.mxu0
        %v411 = vadd.f32 %v345, %v410
        %412 = vmatmul.bf16.gmra.mxu0 %v328
        %v413 = vpop.f32.mrf.mxu0
        %v414 = vadd.f32 %v345, %v413
        %v415 = vpop.f32.mrf.mxu0
        %v416 = vadd.f32 %v345, %v415
        %417 = vdwg.mxu0
        %v418 = vmax.f32 %v404, 0.0
        %v419 = vmax.f32 %v406, 0.0
        %v420 = vmax.f32 %v409, 0.0
        %v421 = vmax.f32 %v411, 0.0
        %v422 = vmax.f32 %v414, 0.0
        %v423 = vmax.f32 %v416, 0.0
        %v424 = vpack.c.bf16 %v419, %v418
        %v425 = vpack.c.bf16 %v421, %v420
        %v426 = vpack.c.bf16 %v423, %v422
        %v427 = vld [vmem:[%s3] sm:$0xf]
        %v428 = vld [vmem:[%s3 + $0x4] sm:$0xf]
        %v429 = vld [vmem:[%s3 + $0x8] sm:$0xf]
        %v430 = vld [vmem:[%s3 + $0xc] sm:$0xf]
        %v431 = vld [vmem:[%s3 + $0x10] sm:$0xf]
        %v432 = vld [vmem:[%s3 + $0x14] sm:$0xf]
        %v433 = vld [vmem:[%s3 + $0x18] sm:$0xf]
        %v434 = vld [vmem:[%s3 + $0x1c] sm:$0xf]
        %v435 = vld [vmem:[%s3 + $0x20] sm:$0xf]
        %v436 = vld [vmem:[%s3 + $0x24] sm:$0xf]
        %v437 = vld [vmem:[%s3 + $0x28] sm:$0xf]
        %v438 = vld [vmem:[%s3 + $0x2c] sm:$0xf]
        %v439 = vld [vmem:[%s3 + $0x30] sm:$0xf]
        %v440 = vld [vmem:[%s3 + $0x34] sm:$0xf]
        %v441 = vld [vmem:[%s3 + $0x38] sm:$0xf]
        %v442 = vld [vmem:[%s3 + $0x3c] sm:$0xf]
        %v443 = vperm.slane %v268, 2
        %v460 = vunpack.c.l.b16 %v427
        %v461 = vunpack.c.l.b16 %v428
        %v462 = vunpack.c.l.b16 %v429
        %v463 = vunpack.c.l.b16 %v430
        %v464 = vunpack.c.l.b16 %v431
        %v465 = vunpack.c.l.b16 %v432
        %v466 = vunpack.c.l.b16 %v433
        %v467 = vunpack.c.l.b16 %v434
        %v468 = vunpack.c.l.b16 %v435
        %v469 = vunpack.c.l.b16 %v436
        %v470 = vunpack.c.l.b16 %v437
        %v471 = vunpack.c.l.b16 %v438
        %v472 = vunpack.c.l.b16 %v439
        %v473 = vunpack.c.l.b16 %v440
        %v474 = vunpack.c.l.b16 %v441
        %v475 = vunpack.c.l.b16 %v442
        %v476 = vpack.c.b16 %v461, %v460
        %v477 = vpack.c.b16 %v463, %v462
        %v478 = vpack.c.b16 %v465, %v464
        %v479 = vpack.c.b16 %v467, %v466
        %v480 = vpack.c.b16 %v469, %v468
        %v481 = vpack.c.b16 %v471, %v470
        %v482 = vpack.c.b16 %v473, %v472
        %v483 = vpack.c.b16 %v475, %v474
        %492 = vmatpush.bf16.msra.mxu0 %v483
        %493 = vmatpush.bf16.msra.mxu0 %v482
        %494 = vmatpush.bf16.msra.mxu0 %v481
        %495 = vmatpush.bf16.msra.mxu0 %v480
        %496 = vmatpush.bf16.msra.mxu0 %v479
        %497 = vmatpush.bf16.msra.mxu0 %v478
        %498 = vmatpush.bf16.msra.mxu0 %v477
        %499 = vmatpush.bf16.msra.mxu0 %v476
        %500 = vmatmul.bf16.gmra.mxu0 %v424
        %v501 = vpop.f32.mrf.mxu0
        %v502 = vadd.f32 %v443, %v501
        %v503 = vpop.f32.mrf.mxu0
        %v504 = vadd.f32 %v443, %v503
        %505 = vmatmul.bf16.gmra.mxu0 %v425
        %v506 = vpop.f32.mrf.mxu0
        %v507 = vadd.f32 %v443, %v506
        %v508 = vpop.f32.mrf.mxu0
        %v509 = vadd.f32 %v443, %v508
        %510 = vmatmul.bf16.gmra.mxu0 %v426
        %v511 = vpop.f32.mrf.mxu0
        %v512 = vadd.f32 %v443, %v511
        %v513 = vpop.f32.mrf.mxu0
        %v514 = vadd.f32 %v443, %v513
        %515 = vdwg.mxu0
        %516 = vst [vmem:[%s250] sm:$0xff] %v502
        %517 = vst [vmem:[%s250 + $0x8] sm:$0xff] %v504
        %518 = vst [vmem:[%s250 + $0x10] sm:$0xff] %v507
        %519 = vst [vmem:[%s250 + $0x18] sm:$0xff] %v509
        %520 = vst [vmem:[%s250 + $0x20] sm:$0xff] %v512
        %521 = vst [vmem:[%s250 + $0x28] sm:$0xff] %v514
        %s522 = sand.u32 %s139, 1
        %s523 = scalar_lea.sflag [#allocation4], %s522
        %s524 = sand.u32 %s139, 1
        %s525 = smul.addr %s524, 48
        %s526 = scalar_lea.vmem [#allocation7], %s525
        // Predicated region
        $region49: #{tpu_custom_call.1} parent=39 // pred_check
          %p527 = pneg %p149
        $region50: #{tpu_custom_call.1} parent=39 // pred_check_branch
          %529 = sbr.rel (%p527) target = $region52
        $region51: #{tpu_custom_call.1} parent=39 // pred_region
          %s530 = smul.u32 6, %s21
          %532 = vsyncadd %s523, 0
          %s533 = smul.addr %s530, 8
          %s534 = scalar_lea.hbm %s5, %s533
          %s535 = sshll.u32 %s526, 4
          %s536 = int_to_ptr.vmem [resolvable:$true] %s535
          %s537 = sshll.u32 %s534, 4
          %s538 = int_to_ptr.hbm [resolvable:$true] %s537
          %543 = dma.vmem_to_hbm [thread:$0]  %s536, 768, %s538, %s523, 128, 128, 8
        $region52: #{tpu_custom_call.1} parent=39 // pred_fallthru
          _
      $region40: #{tpu_custom_call.1} parent=5 // pred_fallthru
        _
      %p544 = scmp.le.s32.totalorder 2, %s16
      // Predicated region
      $region53: #{tpu_custom_call.1} parent=5 // pred_check
        %p545 = pneg %p544
      $region54: #{tpu_custom_call.1} parent=5 // pred_check_branch
        %547 = sbr.rel (%p545) target = $region56
      $region55: #{tpu_custom_call.1} parent=5 // pred_region
        %s548 = ssub.s32 %s16, 2
        // Predicated region
        $region57: #{tpu_custom_call.1} parent=55 // pred_check
          %p549 = pneg %p155
        $region58: #{tpu_custom_call.1} parent=55 // pred_check_branch
          %551 = sbr.rel (%p549) target = $region60
        $region59: #{tpu_custom_call.1} parent=55 // pred_region
          %s552 = sand.u32 %s140, 1
          %s553 = scalar_lea.sflag [#allocation4], %s552
          %s554 = sand.u32 %s140, 1
          %s555 = smul.addr %s554, 48
          %s556 = scalar_lea.vmem [#allocation7], %s555
          %558 = dma.done %s553, 768
        $region60: #{tpu_custom_call.1} parent=55 // pred_fallthru
          _
      $region56: #{tpu_custom_call.1} parent=5 // pred_fallthru
        _
    $region6: #{tpu_custom_call.1} parent=1 // loop_footer
      %s20 = sadd.s32 1, %s16
    $region7: #{tpu_custom_call.1} parent=1 // loop_footer_branch
      %15 = sbr.rel target = $region3
    $region8: #{tpu_custom_call.1} parent=1 // loop_exit
      _
    %559 = vsyncpa [#allocation3], 1
    %s560 = scalar_lea.sflag [#allocation3], 1
    %561 = vsyncpa %s560, 1
    %562 = vsyncpa [#allocation6], 1
    %563 = vsyncpa [#allocation4], 1
    %s564 = scalar_lea.sflag [#allocation4], 1
    %565 = vsyncpa %s564, 1

</llo_original>
